<compile_context>
chip_gen: v7x
topology: tpu7x:2x2x1
jax: 0.10.0
libtpu: 0.0.40
codegen_flags: <defaults>
</compile_context>

<pallas_src>
import jax
import jax.numpy as jnp
from jax.experimental import pallas as pl
from jax.experimental.pallas import tpu as pltpu


def _round_up(x, m):
    return ((x + m - 1) // m) * m


def actor_kernel(xt_ref, w1_ref, b1_ref, w2_ref, b2_ref, w3_ref, b3_ref, out_ref):
    # Transposed orientation: batch on the lane axis for every operand and the store.
    xt = xt_ref[...]                                                     # (S, TB) bf16
    h1 = jnp.dot(w1_ref[...], xt, preferred_element_type=jnp.float32)    # (64, TB) f32
    h1 = jnp.maximum(h1 + b1_ref[...], 0.0)
    h2 = jnp.dot(w2_ref[...], h1.astype(jnp.bfloat16),
                 preferred_element_type=jnp.float32)                     # (32, TB) f32
    h2 = jnp.maximum(h2 + b2_ref[...], 0.0)
    out = jnp.dot(w3_ref[...], h2.astype(jnp.bfloat16),
                  preferred_element_type=jnp.float32)                    # (A, TB) f32
    out_ref[...] = (out + b3_ref[...]).astype(out_ref.dtype)


def actor_forward(state, params, *, max_tile_b=1024):
    """state: [B, state_dim] float32; params: dict w1,b1,w2,b2,w3,b3 (PyTorch layout)."""
    B, state_dim = state.shape
    h1_dim = params["w1"].shape[0]
    h2_dim = params["w2"].shape[0]
    action_dim = params["w3"].shape[0]

    # Batch (lane axis) padded to a multiple of 128; big tiles amortize the ~0.35us
    # per-grid-step overhead and give the BlockSpec pipeline large DMAs to overlap.
    b_pad = _round_up(B, 128)
    tile_b = min(max_tile_b, b_pad)
    b_pad = _round_up(b_pad, tile_b)
    grid = (b_pad // tile_b,)

    # bf16 MXU inputs, f32 biases (bias-add / ReLU run in f32 inside the kernel).
    xt = jnp.pad(state.astype(jnp.bfloat16).T, ((0, 0), (0, b_pad - B)))
    w1 = params["w1"].astype(jnp.bfloat16)
    w2 = params["w2"].astype(jnp.bfloat16)
    w3 = params["w3"].astype(jnp.bfloat16)
    b1 = params["b1"].astype(jnp.float32)
    b2 = params["b2"].astype(jnp.float32)
    b3 = params["b3"].astype(jnp.float32)

    resident = lambda i: (0, 0)      # weights/biases: loaded once, stay in VMEM
    batch_tile = lambda i: (0, i)    # walk the batch along the lane axis

    flops = 2 * b_pad * (state_dim * h1_dim + h1_dim * h2_dim + h2_dim * action_dim)
    weight_bytes = (w1.size + w2.size + w3.size) * 2 + (b1.size + b2.size + b3.size) * 4
    bytes_accessed = b_pad * state_dim * 2 + b_pad * action_dim * 4 + weight_bytes

    out_t = pl.pallas_call(
        actor_kernel,
        out_shape=jax.ShapeDtypeStruct((action_dim, b_pad), jnp.float32),
        grid_spec=pltpu.PrefetchScalarGridSpec(
            num_scalar_prefetch=0,
            grid=grid,
            in_specs=[
                pl.BlockSpec((state_dim, tile_b), batch_tile),   # state tile (pipelined)
                pl.BlockSpec((h1_dim, state_dim), resident),     # w1
                pl.BlockSpec((h1_dim, 1), resident),             # b1
                pl.BlockSpec((h2_dim, h1_dim), resident),        # w2
                pl.BlockSpec((h2_dim, 1), resident),             # b2
                pl.BlockSpec((action_dim, h2_dim), resident),    # w3
                pl.BlockSpec((action_dim, 1), resident),         # b3
            ],
            out_specs=pl.BlockSpec((action_dim, tile_b), batch_tile),
        ),
        compiler_params=pltpu.CompilerParams(
            dimension_semantics=("parallel",),   # shard batch tiles across v7x's 2 TCs
            vmem_limit_bytes=32 << 20,           # well under v7x 64 MiB / v5e-v6e 128 MiB
        ),
        cost_estimate=pl.CostEstimate(
            flops=flops, transcendentals=0, bytes_accessed=bytes_accessed),
    )(xt, w1, b1, w2, b2, w3, b3)

    # Back to the module's [B, action_dim] layout (tiny XLA transpose + slice).
    return out_t[:, :B].T


def init_actor_params(key, state_dim, action_dim):
    """Mirrors the PyTorch module: default Linear init for layers 1/2,
    linear3.weight ~ U(-0.03, 0.03) (bias of linear3 keeps the default bound)."""
    k1, k2, k3, k4, k5, k6 = jax.random.split(key, 6)

    def lin(kw, kb, fan_in, fan_out, w_bound=None):
        w_b = (1.0 / float(fan_in) ** 0.5) if w_bound is None else w_bound
        b_b = 1.0 / float(fan_in) ** 0.5
        w = jax.random.uniform(kw, (fan_out, fan_in), jnp.float32, -w_b, w_b)
        b = jax.random.uniform(kb, (fan_out, 1), jnp.float32, -b_b, b_b)
        return w, b

    w1, b1 = lin(k1, k2, state_dim, 64)
    w2, b2 = lin(k3, k4, 64, 32)
    w3, b3 = lin(k5, k6, 32, action_dim, w_bound=0.03)
    return {"w1": w1, "b1": b1, "w2": w2, "b2": b2, "w3": w3, "b3": b3}


def actor_reference(state, p, *, bf16=True):
    """Pure-JAX reference; bf16=True mirrors the kernel's input precision."""
    dt = jnp.bfloat16 if bf16 else jnp.float32
    x = state.astype(dt)
    h1 = jnp.maximum(
        jnp.dot(x, p["w1"].astype(dt).T, preferred_element_type=jnp.float32) + p["b1"].T, 0.0)
    h2 = jnp.maximum(
        jnp.dot(h1.astype(dt), p["w2"].astype(dt).T, preferred_element_type=jnp.float32) + p["b2"].T, 0.0)
    return (jnp.dot(h2.astype(dt), p["w3"].astype(dt).T, preferred_element_type=jnp.float32)
            + p["b3"].T)


if __name__ == "__main__":
    key = jax.random.PRNGKey(0)
    k_state, k_params = jax.random.split(key)

    batch = 8
    state_dim = 16
    action_dim = 4

    state = jax.random.normal(k_state, (batch, state_dim), jnp.float32)
    params = init_actor_params(k_params, state_dim, action_dim)

    action = actor_forward(state, params)
    action = jax.block_until_ready(action)

    ref_bf16 = actor_reference(state, params, bf16=True)
    ref_f32 = actor_reference(state, params, bf16=False)

    assert action.shape == (batch, action_dim)
    assert jnp.allclose(action, ref_bf16, atol=2e-3, rtol=2e-3), "mismatch vs bf16-matched reference"
    assert jnp.allclose(action, ref_f32, atol=5e-2, rtol=5e-2), "mismatch vs f32 reference"

    print("KERNEL_OK")
</pallas_src>

<mosaic_0001>
module attributes {stable_mosaic.version = 11 : i64} {
  func.func @actor_kernel(%arg0: i32, %arg1: memref<16x128xbf16, #tpu.memory_space<vmem>>, %arg2: memref<64x16xbf16, #tpu.memory_space<vmem>>, %arg3: memref<64x1xf32, #tpu.memory_space<vmem>>, %arg4: memref<32x64xbf16, #tpu.memory_space<vmem>>, %arg5: memref<32x1xf32, #tpu.memory_space<vmem>>, %arg6: memref<4x32xbf16, #tpu.memory_space<vmem>>, %arg7: memref<4x1xf32, #tpu.memory_space<vmem>>, %arg8: memref<4x128xf32, #tpu.memory_space<vmem>>) attributes {dimension_semantics = [#tpu.dimension_semantics<parallel>], iteration_bounds = array<i64: 1>, scalar_prefetch = 0 : i64, scratch_operands = 0 : i64, tpu.core_type = #tpu.core_type<tc>, window_params = [{transform_indices = @transform_0, window_bounds = array<i64: 16, 128>}, {pipeline_mode = #tpu.pipeline_mode<synchronous>, transform_indices = @transform_1, window_bounds = array<i64: 64, 16>}, {pipeline_mode = #tpu.pipeline_mode<synchronous>, transform_indices = @transform_2, window_bounds = array<i64: 64, 1>}, {pipeline_mode = #tpu.pipeline_mode<synchronous>, transform_indices = @transform_3, window_bounds = array<i64: 32, 64>}, {pipeline_mode = #tpu.pipeline_mode<synchronous>, transform_indices = @transform_4, window_bounds = array<i64: 32, 1>}, {pipeline_mode = #tpu.pipeline_mode<synchronous>, transform_indices = @transform_5, window_bounds = array<i64: 4, 32>}, {pipeline_mode = #tpu.pipeline_mode<synchronous>, transform_indices = @transform_6, window_bounds = array<i64: 4, 1>}, {transform_indices = @transform_7, window_bounds = array<i64: 4, 128>}]} {
    %c0 = arith.constant 0 : index
    %c0_0 = arith.constant 0 : index
    %0 = vector.load %arg1[%c0, %c0_0] : memref<16x128xbf16, #tpu.memory_space<vmem>>, vector<16x128xbf16>
    %c0_1 = arith.constant 0 : index
    %c0_2 = arith.constant 0 : index
    %1 = vector.load %arg2[%c0_1, %c0_2] : memref<64x16xbf16, #tpu.memory_space<vmem>>, vector<64x16xbf16>
    %cst = arith.constant dense<0.000000e+00> : vector<64x128xf32>
    %2 = tpu.matmul %1, %0, %cst {dimension_numbers = #tpu.dot_dimension_numbers<[1], [0], [0], [1], [0, 0, 1, 1], [], []>} : vector<64x16xbf16>, vector<16x128xbf16>, vector<64x128xf32> -> vector<64x128xf32>
    %c0_3 = arith.constant 0 : index
    %c0_4 = arith.constant 0 : index
    %3 = vector.load %arg3[%c0_3, %c0_4] : memref<64x1xf32, #tpu.memory_space<vmem>>, vector<64x1xf32>
    %4 = vector.broadcast %3 : vector<64x1xf32> to vector<64x128xf32>
    %5 = arith.addf %2, %4 : vector<64x128xf32>
    %cst_5 = arith.constant 0.000000e+00 : f32
    %6 = vector.broadcast %cst_5 : f32 to vector<64x128xf32>
    %7 = arith.maximumf %5, %6 : vector<64x128xf32>
    %c0_6 = arith.constant 0 : index
    %c0_7 = arith.constant 0 : index
    %8 = vector.load %arg4[%c0_6, %c0_7] : memref<32x64xbf16, #tpu.memory_space<vmem>>, vector<32x64xbf16>
    %9 = arith.truncf %7 : vector<64x128xf32> to vector<64x128xbf16>
    %cst_8 = arith.constant dense<0.000000e+00> : vector<32x128xf32>
    %10 = tpu.matmul %8, %9, %cst_8 {dimension_numbers = #tpu.dot_dimension_numbers<[1], [0], [0], [1], [0, 0, 1, 1], [], []>} : vector<32x64xbf16>, vector<64x128xbf16>, vector<32x128xf32> -> vector<32x128xf32>
    %c0_9 = arith.constant 0 : index
    %c0_10 = arith.constant 0 : index
    %11 = vector.load %arg5[%c0_9, %c0_10] : memref<32x1xf32, #tpu.memory_space<vmem>>, vector<32x1xf32>
    %12 = vector.broadcast %11 : vector<32x1xf32> to vector<32x128xf32>
    %13 = arith.addf %10, %12 : vector<32x128xf32>
    %cst_11 = arith.constant 0.000000e+00 : f32
    %14 = vector.broadcast %cst_11 : f32 to vector<32x128xf32>
    %15 = arith.maximumf %13, %14 : vector<32x128xf32>
    %c0_12 = arith.constant 0 : index
    %c0_13 = arith.constant 0 : index
    %16 = vector.load %arg6[%c0_12, %c0_13] : memref<4x32xbf16, #tpu.memory_space<vmem>>, vector<4x32xbf16>
    %17 = arith.truncf %15 : vector<32x128xf32> to vector<32x128xbf16>
    %cst_14 = arith.constant dense<0.000000e+00> : vector<4x128xf32>
    %18 = tpu.matmul %16, %17, %cst_14 {dimension_numbers = #tpu.dot_dimension_numbers<[1], [0], [0], [1], [0, 0, 1, 1], [], []>} : vector<4x32xbf16>, vector<32x128xbf16>, vector<4x128xf32> -> vector<4x128xf32>
    %c0_15 = arith.constant 0 : index
    %c0_16 = arith.constant 0 : index
    %19 = vector.load %arg7[%c0_15, %c0_16] : memref<4x1xf32, #tpu.memory_space<vmem>>, vector<4x1xf32>
    %20 = vector.broadcast %19 : vector<4x1xf32> to vector<4x128xf32>
    %21 = arith.addf %18, %20 : vector<4x128xf32>
    %c0_17 = arith.constant 0 : index
    %c0_18 = arith.constant 0 : index
    %22 = vector.load %arg8[%c0_17, %c0_18] : memref<4x128xf32, #tpu.memory_space<vmem>>, vector<4x128xf32>
    tpu.vector_store %arg8[%c0_17, %c0_18], %21 {strides = array<i32>} : memref<4x128xf32, #tpu.memory_space<vmem>>, vector<4x128xf32>,
    return
  }
  func.func @transform_0(%arg0: i32) -> (i32, i32) {
    %c0_i32 = arith.constant 0 : i32
    %c0_i32_0 = arith.constant 0 : i32
    return %c0_i32, %arg0 : i32, i32
  }
  func.func @transform_1(%arg0: i32) -> (i32, i32) {
    %c0_i32 = arith.constant 0 : i32
    %c0_i32_0 = arith.constant 0 : i32
    %c0_i32_1 = arith.constant 0 : i32
    return %c0_i32, %c0_i32_0 : i32, i32
  }
  func.func @transform_2(%arg0: i32) -> (i32, i32) {
    %c0_i32 = arith.constant 0 : i32
    %c0_i32_0 = arith.constant 0 : i32
    %c0_i32_1 = arith.constant 0 : i32
    return %c0_i32, %c0_i32_0 : i32, i32
  }
  func.func @transform_3(%arg0: i32) -> (i32, i32) {
    %c0_i32 = arith.constant 0 : i32
    %c0_i32_0 = arith.constant 0 : i32
    %c0_i32_1 = arith.constant 0 : i32
    return %c0_i32, %c0_i32_0 : i32, i32
  }
  func.func @transform_4(%arg0: i32) -> (i32, i32) {
    %c0_i32 = arith.constant 0 : i32
    %c0_i32_0 = arith.constant 0 : i32
    %c0_i32_1 = arith.constant 0 : i32
    return %c0_i32, %c0_i32_0 : i32, i32
  }
  func.func @transform_5(%arg0: i32) -> (i32, i32) {
    %c0_i32 = arith.constant 0 : i32
    %c0_i32_0 = arith.constant 0 : i32
    %c0_i32_1 = arith.constant 0 : i32
    return %c0_i32, %c0_i32_0 : i32, i32
  }
  func.func @transform_6(%arg0: i32) -> (i32, i32) {
    %c0_i32 = arith.constant 0 : i32
    %c0_i32_0 = arith.constant 0 : i32
    %c0_i32_1 = arith.constant 0 : i32
    return %c0_i32, %c0_i32_0 : i32, i32
  }
  func.func @transform_7(%arg0: i32) -> (i32, i32) {
    %c0_i32 = arith.constant 0 : i32
    %c0_i32_0 = arith.constant 0 : i32
    return %c0_i32, %arg0 : i32, i32
  }
}

</mosaic_0001>

<llo_original>
// kernel: tpu_custom_call.1
$region0: #{tpu_custom_call.1}
  #allocation0 [shape = 'u32[]', space=smem, size = 0x4, offset = 0x4, fixed_abs, tag = 'smem constant byte address 0x4 - core index']
  #allocation1 [shape = 'u32[144,128]{1,0:T(1,128)}', space=vmem, size = 0x12000, scoped, tag = 'internal scratch']
  %s0 = inlined_call_operand.vmem [shape: bf16[16,128], index: 0, kind: input, shape index: {}]
  %s1 = inlined_call_operand.vmem [shape: bf16[64,16], index: 1, kind: input, shape index: {}]
  %s2 = inlined_call_operand.vmem [shape: f32[64,1], index: 2, kind: input, shape index: {}]
  %s3 = inlined_call_operand.vmem [shape: bf16[32,64], index: 3, kind: input, shape index: {}]
  %s4 = inlined_call_operand.vmem [shape: f32[32,1], index: 4, kind: input, shape index: {}]
  %s5 = inlined_call_operand.vmem [shape: bf16[4,32], index: 5, kind: input, shape index: {}]
  %s6 = inlined_call_operand.vmem [shape: f32[4,1], index: 6, kind: input, shape index: {}]
  %s7 = inlined_call_operand.hbm [shape: f32[4,128], index: 7, kind: output, shape index: {}]
  %s8 = sld [smem:[#allocation0]]
  $region38: #{tpu_custom_call.1} parent=0
    _
  %s10 = ssub.s32 1, %s8
  %s11 = scalar_select 0, %s10, %s8
  $region1: #{tpu_custom_call.1} parent=0
    #allocation2 [shape = 'u8[2048]{0}', space=vmem, size = 0x800, scoped, tag = 'output window, operand 0, single buffered']
    #allocation3 [shape = 's32[1]{0}', space=sflag, size = 0x4, scoped, tag = 'scoped memory for tpu_custom_call.1']
    %12 = vsyncpa [#allocation3], 0
    // Predicated region
    $region2: #{tpu_custom_call.1} parent=1 // pred_check
      _
    $region3: #{tpu_custom_call.1} parent=1 // pred_check_branch
      %14 = sbr.rel (0) target = $region5
    $region4: #{tpu_custom_call.1} parent=1 // pred_region
      _
    $region5: #{tpu_custom_call.1} parent=1 // pred_fallthru
      _
    // Predicated region
    $region6: #{tpu_custom_call.1} parent=1 // pred_check
      _
    $region7: #{tpu_custom_call.1} parent=1 // pred_check_branch
      %16 = sbr.rel (0) target = $region9
    $region8: #{tpu_custom_call.1} parent=1 // pred_region
      _
    $region9: #{tpu_custom_call.1} parent=1 // pred_fallthru
      _
    // Predicated region
    $region10: #{tpu_custom_call.1} parent=1 // pred_check
      _
    $region11: #{tpu_custom_call.1} parent=1 // pred_check_branch
      %18 = sbr.rel (0) target = $region13
    $region12: #{tpu_custom_call.1} parent=1 // pred_region
      _
    $region13: #{tpu_custom_call.1} parent=1 // pred_fallthru
      _
    // Predicated region
    $region14: #{tpu_custom_call.1} parent=1 // pred_check
      _
    $region15: #{tpu_custom_call.1} parent=1 // pred_check_branch
      %20 = sbr.rel (0) target = $region17
    $region16: #{tpu_custom_call.1} parent=1 // pred_region
      _
    $region17: #{tpu_custom_call.1} parent=1 // pred_fallthru
      _
    // Predicated region
    $region18: #{tpu_custom_call.1} parent=1 // pred_check
      _
    $region19: #{tpu_custom_call.1} parent=1 // pred_check_branch
      %22 = sbr.rel (0) target = $region21
    $region20: #{tpu_custom_call.1} parent=1 // pred_region
      _
    $region21: #{tpu_custom_call.1} parent=1 // pred_fallthru
      _
    // Predicated region
    $region22: #{tpu_custom_call.1} parent=1 // pred_check
      _
    $region23: #{tpu_custom_call.1} parent=1 // pred_check_branch
      %24 = sbr.rel (0) target = $region25
    $region24: #{tpu_custom_call.1} parent=1 // pred_region
      _
    $region25: #{tpu_custom_call.1} parent=1 // pred_fallthru
      _
    // Predicated region
    $region26: #{tpu_custom_call.1} parent=1 // pred_check
      _
    $region27: #{tpu_custom_call.1} parent=1 // pred_check_branch
      %26 = sbr.rel (0) target = $region29
    $region28: #{tpu_custom_call.1} parent=1 // pred_region
      _
    $region29: #{tpu_custom_call.1} parent=1 // pred_fallthru
      _
    %v28 = vld [vmem:[%s0] sm:$0xf]
    %v29 = vld [vmem:[%s0 + $0x4] sm:$0xf]
    %v30 = vld [vmem:[%s1] sm:$0xf]
    %v31 = vld [vmem:[%s1 + $0x4] sm:$0xf]
    %v32 = vld [vmem:[%s1 + $0x8] sm:$0xf]
    %v33 = vld [vmem:[%s1 + $0xc] sm:$0xf]
    %v34 = vld [vmem:[%s1 + $0x10] sm:$0xf]
    %v35 = vld [vmem:[%s1 + $0x14] sm:$0xf]
    %v36 = vld [vmem:[%s1 + $0x18] sm:$0xf]
    %v37 = vld [vmem:[%s1 + $0x1c] sm:$0xf]
    %v38 = vld [vmem:[%s2] sm:$0xff]
    %v39 = vld [vmem:[%s2 + $0x8] sm:$0xff]
    %v40 = vld [vmem:[%s2 + $0x10] sm:$0xff]
    %v41 = vld [vmem:[%s2 + $0x18] sm:$0xff]
    %v42 = vld [vmem:[%s2 + $0x20] sm:$0xff]
    %v43 = vld [vmem:[%s2 + $0x28] sm:$0xff]
    %v44 = vld [vmem:[%s2 + $0x30] sm:$0xff]
    %v45 = vld [vmem:[%s2 + $0x38] sm:$0xff]
    %47 = vset.pattern.permute.xlu0 0
    %48 = vperm.xlu0 %47, %v38
    %v49 = vpop.permute.xlu0 %48
    %52 = vset.pattern.permute.xlu0 0
    %53 = vperm.xlu0 %52, %v39
    %v54 = vpop.permute.xlu0 %53
    %57 = vset.pattern.permute.xlu0 0
    %58 = vperm.xlu0 %57, %v40
    %v59 = vpop.permute.xlu0 %58
    %62 = vset.pattern.permute.xlu0 0
    %63 = vperm.xlu0 %62, %v41
    %v64 = vpop.permute.xlu0 %63
    %67 = vset.pattern.permute.xlu0 0
    %68 = vperm.xlu0 %67, %v42
    %v69 = vpop.permute.xlu0 %68
    %72 = vset.pattern.permute.xlu0 0
    %73 = vperm.xlu0 %72, %v43
    %v74 = vpop.permute.xlu0 %73
    %77 = vset.pattern.permute.xlu0 0
    %78 = vperm.xlu0 %77, %v44
    %v79 = vpop.permute.xlu0 %78
    %82 = vset.pattern.permute.xlu0 0
    %83 = vperm.xlu0 %82, %v45
    %v84 = vpop.permute.xlu0 %83
    %v94 = vunpack.c.l.b16 %v30
    %v95 = vunpack.c.l.b16 %v31
    %v96 = vunpack.c.l.b16 %v32
    %v97 = vunpack.c.l.b16 %v33
    %v98 = vunpack.c.l.b16 %v34
    %v99 = vunpack.c.l.b16 %v35
    %v100 = vunpack.c.l.b16 %v36
    %v101 = vunpack.c.l.b16 %v37
    %v102 = vpack.c.b16 %v95, %v94
    %v103 = vpack.c.b16 %v97, %v96
    %v104 = vpack.c.b16 %v99, %v98
    %v105 = vpack.c.b16 %v101, %v100
    %v108 = vunpack.c.l.b16 %v28
    %v109 = vunpack.c.l.b16 %v29
    %v110 = vpack.c.b16 %v109, %v108
    %vm112 = vcmask 130048
    %v114 = vsel %vm112, %v102, 0
    %v117 = vsel %vm112, %v103, 0
    %v120 = vsel %vm112, %v104, 0
    %v123 = vsel %vm112, %v105, 0
    %125 = vmatprep.subr.bf16.mxu0 0
    %126 = vmatpush1.bf16.msra.mxu0 %v110
    %127 = vmatprep.subr.bf16.mxu0 0
    %128 = vmatpush1.bf16.msra.mxu0 0
    %129 = vmatprep.subr.bf16.mxu0 0
    %130 = vmatpush1.bf16.msra.mxu0 0
    %131 = vmatprep.subr.bf16.mxu0 0
    %132 = vmatpush1.bf16.msra.mxu0 0
    %133 = vmatprep.subr.bf16.mxu0 0
    %134 = vmatpush1.bf16.msra.mxu0 0
    %135 = vmatprep.subr.bf16.mxu0 0
    %136 = vmatpush1.bf16.msra.mxu0 0
    %137 = vmatprep.subr.bf16.mxu0 0
    %138 = vmatpush1.bf16.msra.mxu0 0
    %139 = vmatprep.subr.bf16.mxu0 0
    %140 = vmatpush1.bf16.msra.mxu0 0
    %141 = vmatprep.subr.bf16.mxu0 0
    %142 = vmatpush1.bf16.msra.mxu0 0
    %143 = vmatprep.subr.bf16.mxu0 0
    %144 = vmatpush1.bf16.msra.mxu0 0
    %145 = vmatprep.subr.bf16.mxu0 0
    %146 = vmatpush1.bf16.msra.mxu0 0
    %147 = vmatprep.subr.bf16.mxu0 0
    %148 = vmatpush1.bf16.msra.mxu0 0
    %149 = vmatprep.subr.bf16.mxu0 0
    %150 = vmatpush1.bf16.msra.mxu0 0
    %151 = vmatprep.subr.bf16.mxu0 0
    %152 = vmatpush1.bf16.msra.mxu0 0
    %153 = vmatprep.subr.bf16.mxu0 0
    %154 = vmatpush1.bf16.msra.mxu0 0
    %155 = vmatprep.subr.bf16.mxu0 0
    %156 = vmatpush1.bf16.msra.mxu0 0
    %157 = vmatprep.mubr.bf16.mxu0 0
    %158 = vmatmul.mubr.bf16.gmra.mrb[0].mxu0 %v114
    %v159 = vpop.f32.mrb[0].mxu0
    %v160 = vadd.f32 %v49, %v159
    %v161 = vpop.f32.mrb[0].mxu0
    %v162 = vpop.f32.mrb[0].mxu0
    %v163 = vadd.f32 %v54, %v162
    %v164 = vpop.f32.mrb[0].mxu0
    %165 = vmatprep.mubr.bf16.mxu0 0
    %166 = vmatmul.mubr.bf16.gmra.mrb[0].mxu0 %v117
    %v167 = vpop.f32.mrb[0].mxu0
    %v168 = vadd.f32 %v59, %v167
    %v169 = vpop.f32.mrb[0].mxu0
    %v170 = vpop.f32.mrb[0].mxu0
    %v171 = vadd.f32 %v64, %v170
    %v172 = vpop.f32.mrb[0].mxu0
    %173 = vmatprep.mubr.bf16.mxu0 0
    %174 = vmatmul.mubr.bf16.gmra.mrb[0].mxu0 %v120
    %v175 = vpop.f32.mrb[0].mxu0
    %v176 = vadd.f32 %v69, %v175
    %v177 = vpop.f32.mrb[0].mxu0
    %v178 = vpop.f32.mrb[0].mxu0
    %v179 = vadd.f32 %v74, %v178
    %v180 = vpop.f32.mrb[0].mxu0
    %181 = vmatprep.mubr.bf16.mxu0 0
    %182 = vmatmul.mubr.bf16.gmra.mrb[0].mxu0 %v123
    %v183 = vpop.f32.mrb[0].mxu0
    %v184 = vadd.f32 %v79, %v183
    %v185 = vpop.f32.mrb[0].mxu0
    %v186 = vpop.f32.mrb[0].mxu0
    %v187 = vadd.f32 %v84, %v186
    %v188 = vpop.f32.mrb[0].mxu0
    %189 = vdwg.mxu0
    %v190 = vmax.f32 %v160, 0.0
    %v191 = vmax.f32 %v163, 0.0
    %v192 = vmax.f32 %v168, 0.0
    %v193 = vmax.f32 %v171, 0.0
    %v194 = vmax.f32 %v176, 0.0
    %v195 = vmax.f32 %v179, 0.0
    %v196 = vmax.f32 %v184, 0.0
    %v197 = vmax.f32 %v187, 0.0
    %v198 = vld [vmem:[%s3] sm:$0xf]
    %v199 = vld [vmem:[%s3 + $0x4] sm:$0xf]
    %v200 = vld [vmem:[%s3 + $0x8] sm:$0xf]
    %v201 = vld [vmem:[%s3 + $0xc] sm:$0xf]
    %v202 = vpack.c.bf16 %v191, %v190
    %v203 = vpack.c.bf16 %v193, %v192
    %v204 = vpack.c.bf16 %v195, %v194
    %v205 = vpack.c.bf16 %v197, %v196
    %v206 = vld [vmem:[%s4] sm:$0xff]
    %v207 = vld [vmem:[%s4 + $0x8] sm:$0xff]
    %v208 = vld [vmem:[%s4 + $0x10] sm:$0xff]
    %v209 = vld [vmem:[%s4 + $0x18] sm:$0xff]
    %211 = vset.pattern.permute.xlu0 0
    %212 = vperm.xlu0 %211, %v206
    %v213 = vpop.permute.xlu0 %212
    %216 = vset.pattern.permute.xlu0 0
    %217 = vperm.xlu0 %216, %v207
    %v218 = vpop.permute.xlu0 %217
    %221 = vset.pattern.permute.xlu0 0
    %222 = vperm.xlu0 %221, %v208
    %v223 = vpop.permute.xlu0 %222
    %226 = vset.pattern.permute.xlu0 0
    %227 = vperm.xlu0 %226, %v209
    %v228 = vpop.permute.xlu0 %227
    %v234 = vunpack.c.l.b16 %v198
    %v235 = vunpack.c.l.b16 %v199
    %v236 = vunpack.c.l.b16 %v200
    %v237 = vunpack.c.l.b16 %v201
    %v238 = vpack.c.b16 %v235, %v234
    %v239 = vpack.c.b16 %v237, %v236
    %vm240 = vcmask 523264
    %v242 = vsel %vm240, %v238, 0
    %v245 = vsel %vm240, %v239, 0
    %247 = vmatprep.subr.bf16.mxu0 0
    %248 = vmatpush1.bf16.msra.mxu0 %v202
    %249 = vmatprep.subr.bf16.mxu0 0
    %250 = vmatpush1.bf16.msra.mxu0 %v203
    %251 = vmatprep.subr.bf16.mxu0 0
    %252 = vmatpush1.bf16.msra.mxu0 %v204
    %253 = vmatprep.subr.bf16.mxu0 0
    %254 = vmatpush1.bf16.msra.mxu0 %v205
    %255 = vmatprep.subr.bf16.mxu0 0
    %256 = vmatpush1.bf16.msra.mxu0 0
    %257 = vmatprep.subr.bf16.mxu0 0
    %258 = vmatpush1.bf16.msra.mxu0 0
    %259 = vmatprep.subr.bf16.mxu0 0
    %260 = vmatpush1.bf16.msra.mxu0 0
    %261 = vmatprep.subr.bf16.mxu0 0
    %262 = vmatpush1.bf16.msra.mxu0 0
    %263 = vmatprep.subr.bf16.mxu0 0
    %264 = vmatpush1.bf16.msra.mxu0 0
    %265 = vmatprep.subr.bf16.mxu0 0
    %266 = vmatpush1.bf16.msra.mxu0 0
    %267 = vmatprep.subr.bf16.mxu0 0
    %268 = vmatpush1.bf16.msra.mxu0 0
    %269 = vmatprep.subr.bf16.mxu0 0
    %270 = vmatpush1.bf16.msra.mxu0 0
    %271 = vmatprep.subr.bf16.mxu0 0
    %272 = vmatpush1.bf16.msra.mxu0 0
    %273 = vmatprep.subr.bf16.mxu0 0
    %274 = vmatpush1.bf16.msra.mxu0 0
    %275 = vmatprep.subr.bf16.mxu0 0
    %276 = vmatpush1.bf16.msra.mxu0 0
    %277 = vmatprep.subr.bf16.mxu0 0
    %278 = vmatpush1.bf16.msra.mxu0 0
    %279 = vmatprep.mubr.bf16.mxu0 0
    %280 = vmatmul.mubr.bf16.gmra.mrb[0].mxu0 %v242
    %v281 = vpop.f32.mrb[0].mxu0
    %v282 = vadd.f32 %v213, %v281
    %v283 = vpop.f32.mrb[0].mxu0
    %v284 = vpop.f32.mrb[0].mxu0
    %v285 = vadd.f32 %v218, %v284
    %v286 = vpop.f32.mrb[0].mxu0
    %287 = vmatprep.mubr.bf16.mxu0 0
    %288 = vmatmul.mubr.bf16.gmra.mrb[0].mxu0 %v245
    %v289 = vpop.f32.mrb[0].mxu0
    %v290 = vadd.f32 %v223, %v289
    %v291 = vpop.f32.mrb[0].mxu0
    %v292 = vpop.f32.mrb[0].mxu0
    %v293 = vadd.f32 %v228, %v292
    %v294 = vpop.f32.mrb[0].mxu0
    %295 = vdwg.mxu0
    %v296 = vmax.f32 %v282, 0.0
    %v297 = vmax.f32 %v285, 0.0
    %v298 = vmax.f32 %v290, 0.0
    %v299 = vmax.f32 %v293, 0.0
    %v300 = vld [vmem:[%s5] sm:$0x3]
    %v301 = vpack.c.bf16 %v297, %v296
    %v302 = vpack.c.bf16 %v299, %v298
    %v303 = vld [vmem:[%s6] sm:$0xf]
    %305 = vset.pattern.permute.xlu0 0
    %306 = vperm.xlu0 %305, %v303
    %v307 = vpop.permute.xlu0 %306
    %vm309 = vcmask 261120
    %v311 = vsel %vm309, %v300, 0
    %313 = vmatprep.subr.bf16.mxu0 0
    %314 = vmatpush1.bf16.msra.mxu0 %v301
    %315 = vmatprep.subr.bf16.mxu0 0
    %316 = vmatpush1.bf16.msra.mxu0 %v302
    %317 = vmatprep.subr.bf16.mxu0 0
    %318 = vmatpush1.bf16.msra.mxu0 0
    %319 = vmatprep.subr.bf16.mxu0 0
    %320 = vmatpush1.bf16.msra.mxu0 0
    %321 = vmatprep.subr.bf16.mxu0 0
    %322 = vmatpush1.bf16.msra.mxu0 0
    %323 = vmatprep.subr.bf16.mxu0 0
    %324 = vmatpush1.bf16.msra.mxu0 0
    %325 = vmatprep.subr.bf16.mxu0 0
    %326 = vmatpush1.bf16.msra.mxu0 0
    %327 = vmatprep.subr.bf16.mxu0 0
    %328 = vmatpush1.bf16.msra.mxu0 0
    %329 = vmatprep.subr.bf16.mxu0 0
    %330 = vmatpush1.bf16.msra.mxu0 0
    %331 = vmatprep.subr.bf16.mxu0 0
    %332 = vmatpush1.bf16.msra.mxu0 0
    %333 = vmatprep.subr.bf16.mxu0 0
    %334 = vmatpush1.bf16.msra.mxu0 0
    %335 = vmatprep.subr.bf16.mxu0 0
    %336 = vmatpush1.bf16.msra.mxu0 0
    %337 = vmatprep.subr.bf16.mxu0 0
    %338 = vmatpush1.bf16.msra.mxu0 0
    %339 = vmatprep.subr.bf16.mxu0 0
    %340 = vmatpush1.bf16.msra.mxu0 0
    %341 = vmatprep.subr.bf16.mxu0 0
    %342 = vmatpush1.bf16.msra.mxu0 0
    %343 = vmatprep.subr.bf16.mxu0 0
    %344 = vmatpush1.bf16.msra.mxu0 0
    %345 = vmatprep.mubr.bf16.mxu0 0
    %346 = vmatmul.mubr.bf16.gmra.mrb[0].mxu0 %v311
    %v347 = vpop.f32.mrb[0].mxu0
    %v348 = vadd.f32 %v307, %v347
    %v349 = vpop.f32.mrb[0].mxu0
    %v350 = vpop.f32.mrb[0].mxu0
    %v351 = vpop.f32.mrb[0].mxu0
    %352 = vdwg.mxu0
    %353 = vst [vmem:[#allocation2] sm:$0xf] %v348
    // Predicated region
    $region30: #{tpu_custom_call.1} parent=1 // pred_check
      _
    $region31: #{tpu_custom_call.1} parent=1 // pred_check_branch
      %355 = sbr.rel (0) target = $region33
    $region32: #{tpu_custom_call.1} parent=1 // pred_region
      %s357 = ssub.s32 64, 64
      %358 = vsyncadd [#allocation3], %s357
      %s360 = sshll.u32 [#allocation2], 4
      %s361 = int_to_ptr.vmem [resolvable:$true] %s360
      %363 = dma.vmem_to_hbm [thread:$0]  %s361, 64, %s7, [#allocation3]
    $region33: #{tpu_custom_call.1} parent=1 // pred_fallthru
      _
    // Predicated region
    $region34: #{tpu_custom_call.1} parent=1 // pred_check
      _
    $region35: #{tpu_custom_call.1} parent=1 // pred_check_branch
      %365 = sbr.rel (0) target = $region37
    $region36: #{tpu_custom_call.1} parent=1 // pred_region
      %366 = dma.done [#allocation3], 64
    $region37: #{tpu_custom_call.1} parent=1 // pred_fallthru
      _
    %367 = vsyncpa [#allocation3], 1

</llo_original>
